<compile_context>
chip_gen: v6e
topology: v6e:2x2x1
jax: 0.10.0
libtpu: 0.0.40
codegen_flags: <defaults>
</compile_context>

<pallas_src>
import jax
import jax.numpy as jnp
from jax import lax
from jax.experimental import pallas as pl
from jax.experimental.pallas import tpu as pltpu

_LANE = 128


def _convblock_kernel(x_ref, w_ref, b_ref, o_ref):
    # x_ref: (bn, Cin, T)      activations, NCHW with H*W flattened onto lanes
    # w_ref: (tile_co, Cin)    1x1-conv weight (resident, same dtype as x)
    # b_ref: (tile_co, 1)      bias, pre-cast to f32 in the wrapper
    # o_ref: (bn, tile_co, T)  lane-dense output tile
    w = w_ref[...]
    bias = b_ref[...]

    def body(n, carry):
        a = jnp.maximum(x_ref[n], 0.0)                            # ReLU (act before conv)
        y = jnp.dot(w, a, preferred_element_type=jnp.float32)     # 1x1 conv == MXU matmul
        o_ref[n] = (y + bias).astype(o_ref.dtype)
        return carry

    lax.fori_loop(0, x_ref.shape[0], body, 0, unroll=True)


def _plan_tiling(N, Cin, Cout, HW, x_itemsize, w_itemsize):
    """Budget-driven, generation-aware tile selection."""
    # ---- VMEM budget ----
    try:
        phys_vmem = int(pltpu.get_tpu_info().vmem_capacity_bytes)
    except Exception:  # pragma: no cover - conservative fallback
        phys_vmem = 64 << 20
    if phys_vmem <= (64 << 20):
        vmem_limit = 40 << 20          # 64 MiB physical per core: leave scratch headroom
    else:
        vmem_limit = 96 << 20          # 128 MiB physical (v5e/v6e): use it
    usable = (vmem_limit * 3) // 4     # keep ~25% of the scoped limit for compiler scratch

    target_step_bytes = 2 << 20        # aim for >= ~2 MB of x+out traffic per grid step

    # ---- Cout tiling: only when output tiles alone would dominate the budget ----
    tile_co = Cout
    if Cout > 8 and Cout % 8 == 0:
        co_cap = (usable // 3) // max(2 * 512 * x_itemsize, 1)
        co_cap = max(8, (co_cap // 8) * 8)
        if tile_co > co_cap:
            tile_co = co_cap
    n_co = pl.cdiv(Cout, tile_co)

    # ---- spatial tile: largest lane-dense tile that fits (double-buffered x+out) ----
    fixed = 2 * tile_co * Cin * w_itemsize + 2 * tile_co * 4      # weight + bias buffers
    per_lane = 2 * (Cin + tile_co) * x_itemsize                   # x + out, double buffered
    max_hw_fit = max((usable - fixed) // per_lane, _LANE)
    if HW <= _LANE:
        tile_hw = HW                                              # full-dim block
    elif HW % _LANE == 0:
        tile_hw = max(_LANE, min(HW, (max_hw_fit // _LANE) * _LANE))
    elif HW <= max_hw_fit:
        tile_hw = HW                                              # full-dim block
    else:
        tile_hw = max(_LANE, (max_hw_fit // _LANE) * _LANE)       # partial last tile masked
    n_hw = pl.cdiv(HW, tile_hw)

    # ---- batch blocking: amortize ~0.35us/step overhead for small-channel shapes ----
    bn = 1
    step_bytes = (Cin + tile_co) * tile_hw * x_itemsize
    if n_hw == 1 and n_co == 1 and N > 1 and step_bytes < target_step_bytes:
        bn = min(N, max(1, target_step_bytes // max(step_bytes, 1)))
        bn_fit = max(1, (usable - fixed) // max(2 * step_bytes, 1))
        bn = int(min(bn, bn_fit))
        while bn > 1 and N % bn != 0:   # keep clean (divisor) batch blocks
            bn -= 1

    # ---- megacore: keep >= 2 grid steps so the second TensorCore isn't idle ----
    if pl.cdiv(N, bn) * n_hw * n_co < 2:
        if bn > 1:
            bn = max(1, bn // 2)
            while bn > 1 and N % bn != 0:
                bn -= 1
        elif HW >= 2 * _LANE:
            tile_hw = max(_LANE, ((HW // 2) // _LANE) * _LANE)
            n_hw = pl.cdiv(HW, tile_hw)

    grid = (pl.cdiv(N, bn), n_hw, n_co)
    return int(bn), int(tile_co), int(tile_hw), tuple(int(g) for g in grid), int(vmem_limit)


def convblock_forward(x_nchw, w, b):
    """ConvBlock forward for kernel_size=1 defaults: y = Conv2d_1x1(ReLU(x)).

    x_nchw: (N, Cin, H, W)
    w:      (Cout, Cin)   PyTorch Conv2d weight (Cout, Cin, 1, 1) squeezed
    b:      (Cout,)       Conv2d bias
    """
    N, Cin, H, W = x_nchw.shape
    Cout = w.shape[0]
    HW = H * W

    # Free (contiguous) reshapes; no NCHW<->NHWC transposes, no extra HBM passes.
    x2 = x_nchw.reshape(N, Cin, HW)
    w2 = w.astype(x_nchw.dtype)                   # bf16 x -> bf16 MXU path; halves weight bytes
    b2 = b.reshape(Cout, 1).astype(jnp.float32)   # pre-cast: no per-step VPU cast in the kernel

    bn, tile_co, tile_hw, grid, vmem_limit = _plan_tiling(
        N, Cin, Cout, HW, x2.dtype.itemsize, w2.dtype.itemsize)

    out_flat = pl.pallas_call(
        _convblock_kernel,
        out_shape=jax.ShapeDtypeStruct((N, Cout, HW), x2.dtype),
        grid_spec=pltpu.PrefetchScalarGridSpec(
            num_scalar_prefetch=0,
            grid=grid,  # (batch blocks, spatial blocks, Cout blocks) - Cout innermost so x is reused
            in_specs=[
                pl.BlockSpec((bn, Cin, tile_hw), lambda nb, i, co: (nb, 0, i)),   # activations
                pl.BlockSpec((tile_co, Cin), lambda nb, i, co: (co, 0)),          # weight
                pl.BlockSpec((tile_co, 1), lambda nb, i, co: (co, 0)),            # bias (f32)
            ],
            out_specs=pl.BlockSpec((bn, tile_co, tile_hw),
                                   lambda nb, i, co: (nb, co, i)),
        ),
        compiler_params=pltpu.CompilerParams(
            dimension_semantics=("parallel", "parallel", "parallel"),
            vmem_limit_bytes=vmem_limit,
        ),
    )(x2, w2, b2)

    # Free reshape back to NCHW.
    return out_flat.reshape(N, Cout, H, W)


if __name__ == "__main__":
    key = jax.random.PRNGKey(0)
    k1, k2, k3 = jax.random.split(key, 3)

    # ConvBlock(in_ch=4, out_ch=8, kernel_size=1) with defaults (ReLU, no BN, stride=1)
    N, Cin, Cout, H, W = 2, 4, 8, 16, 16
    x = jax.random.normal(k1, (N, Cin, H, W), jnp.float32)
    w_pt = jax.random.normal(k2, (Cout, Cin, 1, 1), jnp.float32) * 0.1  # Conv2d weight
    b = jax.random.normal(k3, (Cout,), jnp.float32) * 0.1               # Conv2d bias
    w = w_pt[:, :, 0, 0]                                                # (Cout, Cin)

    out = jax.block_until_ready(convblock_forward(x, w, b))

    # Pure-JAX reference: ReLU -> 1x1 conv (+ bias)
    a = jnp.maximum(x, 0.0)
    ref = jnp.einsum("oi,nihw->nohw", w, a) + b[None, :, None, None]

    assert out.shape == (N, Cout, H, W)
    assert jnp.allclose(out, ref, atol=1e-5, rtol=1e-5), "mismatch vs reference"
    print("KERNEL_OK")
</pallas_src>

<mosaic_0001>
module attributes {stable_mosaic.version = 11 : i64} {
  func.func @_convblock_kernel(%arg0: i32, %arg1: i32, %arg2: i32, %arg3: memref<1x4x256xf32, #tpu.memory_space<vmem>>, %arg4: memref<8x4xf32, #tpu.memory_space<vmem>>, %arg5: memref<8x1xf32, #tpu.memory_space<vmem>>, %arg6: memref<1x8x256xf32, #tpu.memory_space<vmem>>) attributes {dimension_semantics = [#tpu.dimension_semantics<parallel>, #tpu.dimension_semantics<parallel>, #tpu.dimension_semantics<parallel>], iteration_bounds = array<i64: 2, 1, 1>, scalar_prefetch = 0 : i64, scratch_operands = 0 : i64, tpu.core_type = #tpu.core_type<tc>, window_params = [{transform_indices = @transform_0, window_bounds = array<i64: 1, 4, 256>}, {transform_indices = @transform_1, window_bounds = array<i64: 8, 4>}, {transform_indices = @transform_2, window_bounds = array<i64: 8, 1>}, {transform_indices = @transform_3, window_bounds = array<i64: 1, 8, 256>}]} {
    %c0 = arith.constant 0 : index
    %c0_0 = arith.constant 0 : index
    %0 = vector.load %arg4[%c0, %c0_0] : memref<8x4xf32, #tpu.memory_space<vmem>>, vector<8x4xf32>
    %c0_1 = arith.constant 0 : index
    %c0_2 = arith.constant 0 : index
    %1 = vector.load %arg5[%c0_1, %c0_2] : memref<8x1xf32, #tpu.memory_space<vmem>>, vector<8x1xf32>
    %c0_i32 = arith.constant 0 : i32
    %2 = arith.index_cast %c0_i32 : i32 to index
    %c0_3 = arith.constant 0 : index
    %c0_4 = arith.constant 0 : index
    %3 = vector.load %arg3[%2, %c0_3, %c0_4] : memref<1x4x256xf32, #tpu.memory_space<vmem>>, vector<1x4x256xf32>
    %4 = vector.shape_cast %3 : vector<1x4x256xf32> to vector<4x256xf32>
    %cst = arith.constant 0.000000e+00 : f32
    %5 = vector.broadcast %cst : f32 to vector<4x256xf32>
    %6 = arith.maximumf %4, %5 : vector<4x256xf32>
    %cst_5 = arith.constant dense<0.000000e+00> : vector<8x256xf32>
    %7 = tpu.matmul %0, %6, %cst_5 {dimension_numbers = #tpu.dot_dimension_numbers<[1], [0], [0], [1], [0, 0, 1, 1], [], []>} : vector<8x4xf32>, vector<4x256xf32>, vector<8x256xf32> -> vector<8x256xf32>
    %8 = vector.broadcast %1 : vector<8x1xf32> to vector<8x256xf32>
    %9 = arith.addf %7, %8 : vector<8x256xf32>
    %10 = arith.index_cast %c0_i32 : i32 to index
    %c0_6 = arith.constant 0 : index
    %c0_7 = arith.constant 0 : index
    %11 = vector.load %arg6[%10, %c0_6, %c0_7] : memref<1x8x256xf32, #tpu.memory_space<vmem>>, vector<1x8x256xf32>
    %12 = vector.shape_cast %11 : vector<1x8x256xf32> to vector<8x256xf32>
    %13 = vector.shape_cast %9 : vector<8x256xf32> to vector<1x8x256xf32>
    tpu.vector_store %arg6[%10, %c0_6, %c0_7], %13 {strides = array<i32>} : memref<1x8x256xf32, #tpu.memory_space<vmem>>, vector<1x8x256xf32>,
    %c1_i32 = arith.constant 1 : i32
    return
  }
  func.func @transform_0(%arg0: i32, %arg1: i32, %arg2: i32) -> (i32, i32, i32) {
    %c0_i32 = arith.constant 0 : i32
    %c0_i32_0 = arith.constant 0 : i32
    return %arg0, %c0_i32, %arg1 : i32, i32, i32
  }
  func.func @transform_1(%arg0: i32, %arg1: i32, %arg2: i32) -> (i32, i32) {
    %c0_i32 = arith.constant 0 : i32
    %c0_i32_0 = arith.constant 0 : i32
    return %arg2, %c0_i32 : i32, i32
  }
  func.func @transform_2(%arg0: i32, %arg1: i32, %arg2: i32) -> (i32, i32) {
    %c0_i32 = arith.constant 0 : i32
    %c0_i32_0 = arith.constant 0 : i32
    return %arg2, %c0_i32 : i32, i32
  }
  func.func @transform_3(%arg0: i32, %arg1: i32, %arg2: i32) -> (i32, i32, i32) {
    %c0_i32 = arith.constant 0 : i32
    return %arg0, %arg2, %arg1 : i32, i32, i32
  }
}

</mosaic_0001>

<llo_original>
// kernel: tpu_custom_call.1
$region0: #{tpu_custom_call.1}
  #allocation0 [shape = 'u32[]', space=smem, size = 0x4, offset = 0x4, fixed_abs, tag = 'smem constant byte address 0x4 - core index']
  #allocation1 [shape = 'u32[144,128]{1,0:T(1,128)}', space=vmem, size = 0x12000, scoped, tag = 'internal scratch']
  %s0 = inlined_call_operand.vmem [shape: f32[2,4,256], index: 0, kind: input, shape index: {}]
  %s1 = inlined_call_operand.vmem [shape: f32[8,4], index: 1, kind: input, shape index: {}]
  %s2 = inlined_call_operand.vmem [shape: f32[8,1], index: 2, kind: input, shape index: {}]
  %s3 = inlined_call_operand.hbm [shape: f32[2,8,256], index: 3, kind: output, shape index: {}]
  %s4 = sld [smem:[#allocation0]]
  $region45: #{tpu_custom_call.1} parent=0
    _
  %s6 = ssub.s32 1, %s4
  %s7 = scalar_select 0, %s6, %s4
  $region1: #{tpu_custom_call.1} parent=0
    #allocation2 [shape = 'u8[16384]{0}', space=vmem, size = 0x4000, scoped, tag = 'output window, operand 0']
    #allocation3 [shape = 's32[2]{0}', space=sflag, size = 0x8, scoped, tag = 'scoped memory for tpu_custom_call.1']
    %8 = vsyncpa [#allocation3], 0
    %s9 = scalar_lea.sflag [#allocation3], 1
    %10 = vsyncpa %s9, 0
    loop: start=0, step=1, limit=4
    $region2: #{tpu_custom_call.1} parent=1 // loop_pre_header
      _
    $region3: #{tpu_custom_call.1} parent=1 // loop_header
      %s12 = sphi 0, %s16
      %p13 = scmp.ge.s32.totalorder %s12, 4
      %s19 = sphi 0, %s38
      %s20 = sphi 0, %s34
      %s21 = sphi 0, %s30
      %s22 = sphi 0, %s19
      %s23 = sphi 0, %s20
      %s24 = sphi 0, %s21
      %s25 = sphi 0, %s22
      %s26 = sphi 0, %s23
      %s27 = sphi 0, %s24
      %s43 = sphi 0, %s45
      %s46 = sphi 0, %s43
      %s47 = sphi 0, %s46
      %s63 = sphi 0, %s47
      %s69 = sphi 0, %s71
      %s72 = sphi 0, %s69
      %s73 = sphi 0, %s72
      %s89 = sphi 0, %s73
      %s95 = sphi 0, %s97
      %s98 = sphi 0, %s95
      %s99 = sphi 0, %s98
      %s115 = sphi 0, %s99
      %s125 = sphi 0, %s127
      %s128 = sphi 0, %s125
      %s129 = sphi 0, %s128
      %s145 = sphi 0, %s129
    $region4: #{tpu_custom_call.1} parent=1 // loop_header_branch
      %15 = sbr.rel (%p13) target = $region8
    $region5: #{tpu_custom_call.1} parent=1 // loop_body
      %s17 = ssub.s32 %s12, 1
      %s18 = ssub.s32 %s12, 2
      %s28 = sadd.s32 1, %s21
      %p29 = scmp.ge.s32.totalorder %s28, 1
      %s30 = scalar_select %p29, 0, %s28
      %s31 = sadd.s32 1, %s20
      %s32 = scalar_select %p29, %s31, %s20
      %p33 = scmp.ge.s32.totalorder %s32, 1
      %s34 = scalar_select %p33, 0, %s32
      %s35 = sadd.s32 1, %s19
      %s36 = scalar_select %p33, %s35, %s19
      %p37 = scmp.ge.s32.totalorder %s36, 2
      %s38 = scalar_select %p37, 0, %s36
      %s39 = ssub.s32 %s19, %s38
      %s40 = ssub.s32 %s20, %s34
      %s41 = sor.u32 %s39, %s40
      %p42 = scmp.eq.s32.totalorder %s41, 0
      %s44 = sadd.s32 %s43, 1
      %s45 = scalar_select %p42, %s43, %s44
      %p48 = pneg %p42
      %p49 = scmp.eq.s32.totalorder %s12, 1
      %p50 = por %p48, %p49
      %p51 = scmp.ne.s32.totalorder %s43, %s46
      %p52 = scmp.eq.s32.totalorder %s12, 0
      %p53 = por %p51, %p52
      %p54 = scmp.ne.s32.totalorder %s43, %s46
      %p55 = scmp.eq.s32.totalorder %s17, 1
      %p56 = por %p54, %p55
      %p57 = scmp.ne.s32.totalorder %s46, %s47
      %p58 = scmp.eq.s32.totalorder %s17, 0
      %p59 = por %p57, %p58
      %p60 = scmp.ne.s32.totalorder %s46, %s47
      %p61 = scmp.eq.s32.totalorder %s18, 1
      %p62 = por %p60, %p61
      %p64 = scmp.ne.s32.totalorder %s47, %s63
      %p65 = scmp.eq.s32.totalorder %s18, 0
      %p66 = por %p64, %p65
      %s67 = ssub.s32 %s21, %s30
      %p68 = scmp.eq.s32.totalorder %s67, 0
      %s70 = sadd.s32 %s69, 1
      %s71 = scalar_select %p68, %s69, %s70
      %p74 = pneg %p68
      %p75 = scmp.eq.s32.totalorder %s12, 1
      %p76 = por %p74, %p75
      %p77 = scmp.ne.s32.totalorder %s69, %s72
      %p78 = scmp.eq.s32.totalorder %s12, 0
      %p79 = por %p77, %p78
      %p80 = scmp.ne.s32.totalorder %s69, %s72
      %p81 = scmp.eq.s32.totalorder %s17, 1
      %p82 = por %p80, %p81
      %p83 = scmp.ne.s32.totalorder %s72, %s73
      %p84 = scmp.eq.s32.totalorder %s17, 0
      %p85 = por %p83, %p84
      %p86 = scmp.ne.s32.totalorder %s72, %s73
      %p87 = scmp.eq.s32.totalorder %s18, 1
      %p88 = por %p86, %p87
      %p90 = scmp.ne.s32.totalorder %s73, %s89
      %p91 = scmp.eq.s32.totalorder %s18, 0
      %p92 = por %p90, %p91
      %s93 = ssub.s32 %s21, %s30
      %p94 = scmp.eq.s32.totalorder %s93, 0
      %s96 = sadd.s32 %s95, 1
      %s97 = scalar_select %p94, %s95, %s96
      %p100 = pneg %p94
      %p101 = scmp.eq.s32.totalorder %s12, 1
      %p102 = por %p100, %p101
      %p103 = scmp.ne.s32.totalorder %s95, %s98
      %p104 = scmp.eq.s32.totalorder %s12, 0
      %p105 = por %p103, %p104
      %p106 = scmp.ne.s32.totalorder %s95, %s98
      %p107 = scmp.eq.s32.totalorder %s17, 1
      %p108 = por %p106, %p107
      %p109 = scmp.ne.s32.totalorder %s98, %s99
      %p110 = scmp.eq.s32.totalorder %s17, 0
      %p111 = por %p109, %p110
      %p112 = scmp.ne.s32.totalorder %s98, %s99
      %p113 = scmp.eq.s32.totalorder %s18, 1
      %p114 = por %p112, %p113
      %p116 = scmp.ne.s32.totalorder %s99, %s115
      %p117 = scmp.eq.s32.totalorder %s18, 0
      %p118 = por %p116, %p117
      %s119 = ssub.s32 %s19, %s38
      %s120 = ssub.s32 %s21, %s30
      %s121 = sor.u32 %s119, %s120
      %s122 = ssub.s32 %s20, %s34
      %s123 = sor.u32 %s121, %s122
      %p124 = scmp.eq.s32.totalorder %s123, 0
      %s126 = sadd.s32 %s125, 1
      %s127 = scalar_select %p124, %s125, %s126
      %p130 = pneg %p124
      %p131 = scmp.eq.s32.totalorder %s12, 1
      %p132 = por %p130, %p131
      %p133 = scmp.ne.s32.totalorder %s125, %s128
      %p134 = scmp.eq.s32.totalorder %s12, 0
      %p135 = por %p133, %p134
      %p136 = scmp.ne.s32.totalorder %s125, %s128
      %p137 = scmp.eq.s32.totalorder %s17, 1
      %p138 = por %p136, %p137
      %p139 = scmp.ne.s32.totalorder %s128, %s129
      %p140 = scmp.eq.s32.totalorder %s17, 0
      %p141 = por %p139, %p140
      %p142 = scmp.ne.s32.totalorder %s128, %s129
      %p143 = scmp.eq.s32.totalorder %s18, 1
      %p144 = por %p142, %p143
      %p146 = scmp.ne.s32.totalorder %s129, %s145
      %p147 = scmp.eq.s32.totalorder %s18, 0
      %p148 = por %p146, %p147
      %p149 = scmp.le.s32.totalorder 1, %s12
      %p150 = scmp.lt.s32.totalorder %s12, 3
      %p151 = pnand %p149, %p150
      %p152 = pneg %p151
      // Predicated region
      $region9: #{tpu_custom_call.1} parent=5 // pred_check
        _
      $region10: #{tpu_custom_call.1} parent=5 // pred_check_branch
        %154 = sbr.rel (%p151) target = $region12
      $region11: #{tpu_custom_call.1} parent=5 // pred_region
        %s155 = ssub.s32 %s12, 1
        // Predicated region
        $region13: #{tpu_custom_call.1} parent=11 // pred_check
          %p156 = pneg %p85
        $region14: #{tpu_custom_call.1} parent=11 // pred_check_branch
          %158 = sbr.rel (%p156) target = $region16
        $region15: #{tpu_custom_call.1} parent=11 // pred_region
          %p159 = scmp.lt.s32.totalorder %s24, 0
          %s160 = scalar_select %p159, %s24, 0
          %s161 = smul.addr %s160, 8
          %s162 = scalar_lea.vmem %s1, %s161
        $region16: #{tpu_custom_call.1} parent=11 // pred_fallthru
          _
        // Predicated region
        $region17: #{tpu_custom_call.1} parent=11 // pred_check
          %p163 = pneg %p111
        $region18: #{tpu_custom_call.1} parent=11 // pred_check_branch
          %165 = sbr.rel (%p163) target = $region20
        $region19: #{tpu_custom_call.1} parent=11 // pred_region
          %p166 = scmp.lt.s32.totalorder %s24, 0
          %s167 = scalar_select %p166, %s24, 0
          %s168 = smul.addr %s167, 8
          %s169 = scalar_lea.vmem %s2, %s168
        $region20: #{tpu_custom_call.1} parent=11 // pred_fallthru
          _
      $region12: #{tpu_custom_call.1} parent=5 // pred_fallthru
        _
      %p170 = scmp.lt.s32.totalorder %s12, 2
      // Predicated region
      $region21: #{tpu_custom_call.1} parent=5 // pred_check
        %p171 = pneg %p170
      $region22: #{tpu_custom_call.1} parent=5 // pred_check_branch
        %173 = sbr.rel (%p171) target = $region24
      $region23: #{tpu_custom_call.1} parent=5 // pred_region
        // Predicated region
        $region25: #{tpu_custom_call.1} parent=23 // pred_check
          %p174 = pneg %p53
        $region26: #{tpu_custom_call.1} parent=23 // pred_check_branch
          %176 = sbr.rel (%p174) target = $region28
        $region27: #{tpu_custom_call.1} parent=23 // pred_region
          %s177 = smul.u32 2, %s20
          %p178 = scmp.lt.s32.totalorder %s19, 1
          %s179 = scalar_select %p178, %s19, 1
          %p180 = scmp.lt.s32.totalorder %s177, 1
          %s181 = scalar_select %p180, %s177, 1
          %s182 = smul.addr %s179, 2
          %s183 = sadd.s32 %s181, %s182
          %s184 = smul.addr %s183, 4
          %s185 = scalar_lea.vmem %s0, %s184
          %s186 = smul.u32 2, %s20
        $region28: #{tpu_custom_call.1} parent=23 // pred_fallthru
          _
      $region24: #{tpu_custom_call.1} parent=5 // pred_fallthru
        _
      %p187 = scmp.le.s32.totalorder 1, %s12
      %p188 = scmp.lt.s32.totalorder %s12, 3
      %p189 = pnand %p187, %p188
      %p190 = pneg %p189
      // Predicated region
      $region29: #{tpu_custom_call.1} parent=5 // pred_check
        _
      $region30: #{tpu_custom_call.1} parent=5 // pred_check_branch
        %192 = sbr.rel (%p189) target = $region32
      $region31: #{tpu_custom_call.1} parent=5 // pred_region
        %s193 = ssub.s32 %s12, 1
        %s194 = smul.u32 2, %s23
        %p195 = scmp.lt.s32.totalorder %s22, 1
        %s196 = scalar_select %p195, %s22, 1
        %p197 = scmp.lt.s32.totalorder %s194, 1
        %s198 = scalar_select %p197, %s194, 1
        %s199 = smul.addr %s196, 2
        %s200 = sadd.s32 %s198, %s199
        %s201 = smul.addr %s200, 4
        %s202 = scalar_lea.vmem %s0, %s201
        %p203 = pneg %p59
        %p204 = pneg %p56
        %p205 = scmp.lt.s32.totalorder %s24, 0
        %s206 = scalar_select %p205, %s24, 0
        %s207 = smul.addr %s206, 8
        %s208 = scalar_lea.vmem %s1, %s207
        %p209 = pneg %p85
        %p210 = pneg %p82
        %p211 = scmp.lt.s32.totalorder %s24, 0
        %s212 = scalar_select %p211, %s24, 0
        %s213 = smul.addr %s212, 8
        %s214 = scalar_lea.vmem %s2, %s213
        %p215 = pneg %p111
        %p216 = pneg %p108
        %p217 = pneg %p141
        %p218 = pneg %p138
        %s219 = sand.u32 %s128, 1
        %s220 = scalar_lea.sflag [#allocation3], %s219
        %s221 = sand.u32 %s128, 1
        %s222 = smul.addr %s221, 16
        %s223 = scalar_lea.vmem [#allocation2], %s222
        %s224 = smul.u32 2, %s23
        %p225 = scmp.lt.s32.totalorder %s22, 1
        %s226 = scalar_select %p225, %s22, 1
        %p227 = scmp.lt.s32.totalorder %s224, 1
        %s228 = scalar_select %p227, %s224, 1
        %s229 = smul.addr %s226, 2
        %s230 = sadd.s32 %s228, %s229
        %s231 = smul.addr %s230, 4
        %s232 = scalar_lea.vmem %s0, %s231
        %s233 = smul.u32 2, %s23
        %p234 = scmp.lt.s32.totalorder %s24, 0
        %s235 = scalar_select %p234, %s24, 0
        %s236 = smul.addr %s235, 8
        %s237 = scalar_lea.vmem %s1, %s236
        %p238 = scmp.lt.s32.totalorder %s24, 0
        %s239 = scalar_select %p238, %s24, 0
        %s240 = smul.addr %s239, 8
        %s241 = scalar_lea.vmem %s2, %s240
        %s242 = smul.u32 2, %s23
        %v243 = vld [vmem:[%s237] sm:$0xff]
        %v244 = vld [vmem:[%s241] sm:$0xff]
        %v245 = vld [vmem:[%s232] sm:$0xff]
        %v246 = vmax.f32 %v245, 0.0
        %248 = vset.pattern.permute.xlu0 0
        %249 = vperm.xlu0 %248, %v244
        %v250 = vpop.permute.xlu0 %249
        %v253 = vcombine.high %v246, %v246
        %vm254 = vcmask 31744
        %v256 = vsel %vm254, %v243, 0
        %vm258 = vcmask 1043456
        %v259 = vsel %vm258, %v246, 0
        %v261 = vsel %vm258, %v253, 0
        %263 = vmatprep.subr.mxu0 0.0
        %264 = vmatpush1.msra.mxu0 0.0
        %265 = vmatprep.subr.mxu0 0.0
        %266 = vmatpush1.msra.mxu0 0.0
        %267 = vmatprep.subr.mxu0 0.0
        %268 = vmatpush1.msra.mxu0 0.0
        %269 = vmatprep.subr.mxu0 0.0
        %270 = vmatpush1.msra.mxu0 0.0
        %271 = vmatprep.subr.mxu0 0.0
        %272 = vmatpush1.msra.mxu0 0.0
        %273 = vmatprep.subr.mxu0 0.0
        %274 = vmatpush1.msra.mxu0 0.0
        %275 = vmatprep.subr.mxu0 0.0
        %276 = vmatpush1.msra.mxu0 0.0
        %277 = vmatprep.subr.mxu0 0.0
        %278 = vmatpush1.msra.mxu0 0.0
        %279 = vmatprep.subr.mxu0 0.0
        %280 = vmatpush1.msra.mxu0 0.0
        %281 = vmatprep.subr.mxu0 0.0
        %282 = vmatpush1.msra.mxu0 0.0
        %283 = vmatprep.subr.mxu0 0.0
        %284 = vmatpush1.msra.mxu0 0.0
        %285 = vmatprep.subr.mxu0 0.0
        %286 = vmatpush1.msra.mxu0 0.0
        %287 = vmatprep.subr.mxu0 0.0
        %288 = vmatpush1.msra.mxu0 0.0
        %289 = vmatprep.subr.mxu0 0.0
        %290 = vmatpush1.msra.mxu0 0.0
        %291 = vmatprep.subr.mxu0 0.0
        %292 = vmatpush1.msra.mxu0 0.0
        %293 = vmatprep.subr.mxu0 %v261
        %294 = vmatpush1.msra.mxu0 %v259
        %295 = vmatprep.subr.mxu0 0.0
        %296 = vmatpush2.msra.mxu0 0.0
        %297 = vmatprep.subr.mxu0 0.0
        %298 = vmatpush2.msra.mxu0 0.0
        %299 = vmatprep.subr.mxu0 0.0
        %300 = vmatpush2.msra.mxu0 0.0
        %301 = vmatprep.subr.mxu0 0.0
        %302 = vmatpush2.msra.mxu0 0.0
        %303 = vmatprep.subr.mxu0 0.0
        %304 = vmatpush2.msra.mxu0 0.0
        %305 = vmatprep.subr.mxu0 0.0
        %306 = vmatpush2.msra.mxu0 0.0
        %307 = vmatprep.subr.mxu0 0.0
        %308 = vmatpush2.msra.mxu0 0.0
        %309 = vmatprep.subr.mxu0 0.0
        %310 = vmatpush2.msra.mxu0 0.0
        %311 = vmatprep.subr.mxu0 0.0
        %312 = vmatpush2.msra.mxu0 0.0
        %313 = vmatprep.subr.mxu0 0.0
        %314 = vmatpush2.msra.mxu0 0.0
        %315 = vmatprep.subr.mxu0 0.0
        %316 = vmatpush2.msra.mxu0 0.0
        %317 = vmatprep.subr.mxu0 0.0
        %318 = vmatpush2.msra.mxu0 0.0
        %319 = vmatprep.subr.mxu0 0.0
        %320 = vmatpush2.msra.mxu0 0.0
        %321 = vmatprep.subr.mxu0 0.0
        %322 = vmatpush2.msra.mxu0 0.0
        %323 = vmatprep.subr.mxu0 0.0
        %324 = vmatpush2.msra.mxu0 0.0
        %325 = vmatprep.subr.mxu0 0.0
        %326 = vmatpush2.msra.mxu0 0.0
        %327 = vmatprep.mubr.f32.mxu0 0.0
        %328 = vmatmul.mubr.f32.gmra.mxu0 %v256
        %v329 = vpop.f32.mrf.mxu0
        %v330 = vadd.f32 %v250, %v329
        %v331 = vpop.f32.mrf.mxu0
        %v332 = vadd.f32 %v250, %v331
        %333 = vdwg.mxu0
        %334 = vst [vmem:[%s223] sm:$0xff] %v330
        %335 = vst [vmem:[%s223 + $0x8] sm:$0xff] %v332
        %s336 = sand.u32 %s128, 1
        %s337 = scalar_lea.sflag [#allocation3], %s336
        %s338 = sand.u32 %s128, 1
        %s339 = smul.addr %s338, 16
        %s340 = scalar_lea.vmem [#allocation2], %s339
        // Predicated region
        $region33: #{tpu_custom_call.1} parent=31 // pred_check
          %p341 = pneg %p138
        $region34: #{tpu_custom_call.1} parent=31 // pred_check_branch
          %343 = sbr.rel (%p341) target = $region36
        $region35: #{tpu_custom_call.1} parent=31 // pred_region
          %s344 = smul.u32 2, %s23
          %s346 = ssub.s32 256, 256
          %347 = vsyncadd %s337, %s346
          %s348 = smul.addr %s24, 2
          %s349 = sadd.s32 %s344, %s348
          %s350 = smul.addr %s22, 2
          %s351 = sadd.s32 %s349, %s350
          %s352 = smul.addr %s351, 128
          %s353 = scalar_lea.hbm %s3, %s352
          %s355 = sshll.u32 %s340, 4
          %s356 = int_to_ptr.vmem [resolvable:$true] %s355
          %358 = dma.vmem_to_hbm [thread:$0]  %s356, 256, %s353, %s337
        $region36: #{tpu_custom_call.1} parent=31 // pred_fallthru
          _
      $region32: #{tpu_custom_call.1} parent=5 // pred_fallthru
        _
      %p359 = scmp.le.s32.totalorder 2, %s12
      // Predicated region
      $region37: #{tpu_custom_call.1} parent=5 // pred_check
        %p360 = pneg %p359
      $region38: #{tpu_custom_call.1} parent=5 // pred_check_branch
        %362 = sbr.rel (%p360) target = $region40
      $region39: #{tpu_custom_call.1} parent=5 // pred_region
        %s363 = ssub.s32 %s12, 2
        // Predicated region
        $region41: #{tpu_custom_call.1} parent=39 // pred_check
          %p364 = pneg %p144
        $region42: #{tpu_custom_call.1} parent=39 // pred_check_branch
          %366 = sbr.rel (%p364) target = $region44
        $region43: #{tpu_custom_call.1} parent=39 // pred_region
          %s367 = sand.u32 %s129, 1
          %s368 = scalar_lea.sflag [#allocation3], %s367
          %s369 = sand.u32 %s129, 1
          %s370 = smul.addr %s369, 16
          %s371 = scalar_lea.vmem [#allocation2], %s370
          %372 = dma.done %s368, 256
        $region44: #{tpu_custom_call.1} parent=39 // pred_fallthru
          _
      $region40: #{tpu_custom_call.1} parent=5 // pred_fallthru
        _
    $region6: #{tpu_custom_call.1} parent=1 // loop_footer
      %s16 = sadd.s32 1, %s12
    $region7: #{tpu_custom_call.1} parent=1 // loop_footer_branch
      %11 = sbr.rel target = $region3
    $region8: #{tpu_custom_call.1} parent=1 // loop_exit
      _
    %373 = vsyncpa [#allocation3], 1
    %s374 = scalar_lea.sflag [#allocation3], 1
    %375 = vsyncpa %s374, 1

</llo_original>
